<compile_context>
chip_gen: v7x
topology: tpu7x:2x2x1
jax: 0.10.0
libtpu: 0.0.40
codegen_flags: <defaults>
</compile_context>

<pallas_src>
import functools

import jax
import jax.numpy as jnp
from jax.experimental import pallas as pl
from jax.experimental.pallas import tpu as pltpu


def _conv_bn_relu_kernel(x_ref, w_ref, scale_ref, shift_ref, o_ref, *,
                         k, img_w, p_rows):
    """Fused conv (implicit im2col, transposed GEMM) + BN(eval) + ReLU for one image.

    x_ref:     (1, Cin, H*W)       bf16  NCHW image flattened over (H, W) (native layout)
    w_ref:     (k*k, Coutp, Cin)   bf16  per-tap weight matrices, Cout sublane-padded to 16
    scale_ref: (Coutp, 1)          f32   folded BN scale
    shift_ref: (Coutp, 1)          f32   folded BN shift
    o_ref:     (1, Coutp, P)       bf16  P = (OH-1)*W + OW flat output positions (lane axis)
    """
    def tap(di, dj):
        off = di * img_w + dj                       # static element offset of this tap
        xw = x_ref[0, :, off:off + p_rows]          # (Cin, P) bf16 shifted window (lane slice)
        return jnp.dot(w_ref[di * k + dj], xw,      # (Coutp, Cin) @ (Cin, P)
                       preferred_element_type=jnp.float32)

    acc = tap(0, 0)                                  # f32 accumulator, (Coutp, P) -- small
    for di in range(k):
        for dj in range(k):
            if di == 0 and dj == 0:
                continue
            acc += tap(di, dj)

    # BN affine + ReLU epilogue in f32; downcast to bf16 only at the lane-dense store.
    y = acc * scale_ref[...] + shift_ref[...]
    o_ref[0] = jnp.maximum(y, 0.0).astype(o_ref.dtype)


def _vmem_limit_bytes():
    """Generation-aware scoped-VMEM cap: ~3/4 of physical (48 MiB v7x, 96 MiB v5e/v6e)."""
    try:
        cap = int(pltpu.get_tpu_info().vmem_capacity_bytes)
    except Exception:
        cap = 64 * 1024 * 1024
    return min(cap * 3 // 4, 100 * 1024 * 1024)


@functools.partial(jax.jit, static_argnames=("kernel_size", "eps"))
def conv_bn_relu(x_nchw, weight, gamma, beta, running_mean, running_var,
                 kernel_size=3, eps=1e-5):
    """Forward of ConvBNReLU (stride=1, padding=0, bias=False, BatchNorm in eval mode).

    x_nchw:  [N, Cin, H, W]     (PyTorch layout; pass bf16 to avoid the only extra cast pass)
    weight:  [Cout, Cin, k, k]  (PyTorch Conv2d layout)
    returns: [N, Cout, OH, OW]  bf16, OH = H-k+1, OW = W-k+1   (bf16 output is the contract)
    """
    k = kernel_size
    n, cin, h, img_w = x_nchw.shape
    cout = weight.shape[0]
    oh, ow = h - k + 1, img_w - k + 1
    p_rows = (oh - 1) * img_w + ow               # flat positions covering every valid pixel
    cpad = pl.cdiv(cout, 16) * 16                # sublane pad for bf16 (16, 128) output tiles

    # --- wrapper glue (metadata reshape; cast only if input isn't already bf16) ---
    x_flat = x_nchw.reshape(n, cin, h * img_w).astype(jnp.bfloat16)

    # per-tap weights: w_taps[di*k+dj] = weight[:, :, di, dj]  as (Coutp, Cin), bf16
    w_taps = jnp.transpose(weight, (2, 3, 0, 1)).reshape(k * k, cout, cin)
    w_taps = jnp.pad(w_taps, ((0, 0), (0, cpad - cout), (0, 0))).astype(jnp.bfloat16)

    # fold BN (eval mode) into per-channel scale/shift, padded to Coutp sublanes
    scale = (gamma / jnp.sqrt(running_var + eps)).astype(jnp.float32)
    shift = (beta - running_mean * scale).astype(jnp.float32)
    scale2 = jnp.pad(scale, (0, cpad - cout)).reshape(cpad, 1)
    shift2 = jnp.pad(shift, (0, cpad - cout)).reshape(cpad, 1)

    kernel = functools.partial(_conv_bn_relu_kernel, k=k, img_w=img_w, p_rows=p_rows)

    # honest advisory cost: logical Cout flops, real bf16 bytes moved
    flops = 2 * n * p_rows * (k * k * cin) * cout
    bytes_accessed = (x_flat.size * 2 + w_taps.size * 2
                      + (scale2.size + shift2.size) * 4 + n * cpad * p_rows * 2)

    out_flat = pl.pallas_call(
        kernel,
        out_shape=jax.ShapeDtypeStruct((n, cpad, p_rows), jnp.bfloat16),
        grid_spec=pltpu.PrefetchScalarGridSpec(
            num_scalar_prefetch=0,
            grid=(n,),
            in_specs=[
                pl.BlockSpec((1, cin, h * img_w), lambda i: (i, 0, 0)),  # one image / step
                pl.BlockSpec((k * k, cpad, cin), lambda i: (0, 0, 0)),   # weights resident
                pl.BlockSpec((cpad, 1), lambda i: (0, 0)),               # BN scale
                pl.BlockSpec((cpad, 1), lambda i: (0, 0)),               # BN shift
            ],
            out_specs=pl.BlockSpec((1, cpad, p_rows), lambda i: (i, 0, 0)),
        ),
        compiler_params=pltpu.CompilerParams(
            dimension_semantics=("parallel",),            # batch axis -> 2 TCs on v7x
            vmem_limit_bytes=_vmem_limit_bytes(),         # generation-aware cap
        ),
        cost_estimate=pl.CostEstimate(flops=flops, transcendentals=0,
                                      bytes_accessed=bytes_accessed),
    )(x_flat, w_taps, scale2, shift2)

    # --- reconstruct NCHW on the (small) final output: pad the k-1 missing trailing flat
    #     positions, reshape, and drop the wrap-around columns + sublane channel padding ---
    out_flat = jnp.pad(out_flat, ((0, 0), (0, 0), (0, oh * img_w - p_rows)))
    out = out_flat.reshape(n, cpad, oh, img_w)[:, :cout, :, :ow]        # NCHW valid region
    return out                                                          # bf16


def _reference(x_nchw, weight, gamma, beta, running_mean, running_var, eps=1e-5):
    """Pure-JAX f32 reference (true conv + eval-mode BN + ReLU)."""
    conv = jax.lax.conv_general_dilated(
        x_nchw.astype(jnp.float32), weight.astype(jnp.float32),
        window_strides=(1, 1), padding="VALID",
        dimension_numbers=("NCHW", "OIHW", "NCHW"))
    scale = gamma / jnp.sqrt(running_var + eps)
    shift = beta - running_mean * scale
    y = conv * scale[None, :, None, None] + shift[None, :, None, None]
    return jnp.maximum(y, 0.0)


if __name__ == "__main__":
    key = jax.random.PRNGKey(0)
    k_x, k_w, k_g, k_b, k_m, k_v = jax.random.split(key, 6)

    N, CIN, H, W = 2, 4, 16, 16
    COUT, KS = 8, 3

    x = jax.random.normal(k_x, (N, CIN, H, W), dtype=jnp.float32)
    # deterministic synthetic parameters (shapes match nn.Conv2d / nn.BatchNorm2d)
    weight = jax.random.normal(k_w, (COUT, CIN, KS, KS), dtype=jnp.float32) * 0.1
    gamma = 1.0 + 0.1 * jax.random.normal(k_g, (COUT,), dtype=jnp.float32)
    beta = 0.1 * jax.random.normal(k_b, (COUT,), dtype=jnp.float32)
    running_mean = 0.1 * jax.random.normal(k_m, (COUT,), dtype=jnp.float32)
    running_var = jnp.abs(1.0 + 0.1 * jax.random.normal(k_v, (COUT,), dtype=jnp.float32))

    out = conv_bn_relu(x, weight, gamma, beta, running_mean, running_var,
                       kernel_size=KS)
    out = jax.block_until_ready(out)

    ref = _reference(x, weight, gamma, beta, running_mean, running_var)
    assert out.shape == (N, COUT, H - KS + 1, W - KS + 1), out.shape
    # bf16 activations/weights/output with f32 accumulation -> compare to the f32 reference
    # with bf16-appropriate tolerance (documented precision contract).
    out_f32 = out.astype(jnp.float32)
    max_err = jnp.max(jnp.abs(out_f32 - ref))
    assert jnp.allclose(out_f32, ref, atol=3e-2, rtol=3e-2), f"mismatch vs reference: {max_err}"

    print("KERNEL_OK")
</pallas_src>

<mosaic_0001>
module attributes {stable_mosaic.version = 11 : i64} {
  func.func @_conv_bn_relu_kernel(%arg0: i32, %arg1: memref<1x4x256xbf16, #tpu.memory_space<vmem>>, %arg2: memref<9x16x4xbf16, #tpu.memory_space<vmem>>, %arg3: memref<16x1xf32, #tpu.memory_space<vmem>>, %arg4: memref<16x1xf32, #tpu.memory_space<vmem>>, %arg5: memref<1x16x222xbf16, #tpu.memory_space<vmem>>) attributes {dimension_semantics = [#tpu.dimension_semantics<parallel>], iteration_bounds = array<i64: 2>, scalar_prefetch = 0 : i64, scratch_operands = 0 : i64, tpu.core_type = #tpu.core_type<tc>, window_params = [{transform_indices = @transform_0, window_bounds = array<i64: 1, 4, 256>}, {pipeline_mode = #tpu.pipeline_mode<synchronous>, transform_indices = @transform_1, window_bounds = array<i64: 9, 16, 4>}, {pipeline_mode = #tpu.pipeline_mode<synchronous>, transform_indices = @transform_2, window_bounds = array<i64: 16, 1>}, {pipeline_mode = #tpu.pipeline_mode<synchronous>, transform_indices = @transform_3, window_bounds = array<i64: 16, 1>}, {transform_indices = @transform_4, window_bounds = array<i64: 1, 16, 222>}]} {
    %c0 = arith.constant 0 : index
    %c0_0 = arith.constant 0 : index
    %c0_1 = arith.constant 0 : index
    %0 = vector.load %arg1[%c0, %c0_0, %c0_1] : memref<1x4x256xbf16, #tpu.memory_space<vmem>>, vector<1x4x222xbf16>
    %1 = vector.shape_cast %0 : vector<1x4x222xbf16> to vector<4x222xbf16>
    %c0_2 = arith.constant 0 : index
    %c0_3 = arith.constant 0 : index
    %c0_4 = arith.constant 0 : index
    %2 = vector.load %arg2[%c0_2, %c0_3, %c0_4] : memref<9x16x4xbf16, #tpu.memory_space<vmem>>, vector<1x16x4xbf16>
    %3 = vector.shape_cast %2 : vector<1x16x4xbf16> to vector<16x4xbf16>
    %cst = arith.constant dense<0.000000e+00> : vector<16x222xf32>
    %4 = tpu.matmul %3, %1, %cst {dimension_numbers = #tpu.dot_dimension_numbers<[1], [0], [0], [1], [0, 0, 1, 1], [], []>} : vector<16x4xbf16>, vector<4x222xbf16>, vector<16x222xf32> -> vector<16x222xf32>
    %c0_5 = arith.constant 0 : index
    %c0_6 = arith.constant 0 : index
    %c1 = arith.constant 1 : index
    %5 = vector.load %arg1[%c0_5, %c0_6, %c1] : memref<1x4x256xbf16, #tpu.memory_space<vmem>>, vector<1x4x222xbf16>
    %6 = vector.shape_cast %5 : vector<1x4x222xbf16> to vector<4x222xbf16>
    %c1_7 = arith.constant 1 : index
    %c0_8 = arith.constant 0 : index
    %c0_9 = arith.constant 0 : index
    %7 = vector.load %arg2[%c1_7, %c0_8, %c0_9] : memref<9x16x4xbf16, #tpu.memory_space<vmem>>, vector<1x16x4xbf16>
    %8 = vector.shape_cast %7 : vector<1x16x4xbf16> to vector<16x4xbf16>
    %cst_10 = arith.constant dense<0.000000e+00> : vector<16x222xf32>
    %9 = tpu.matmul %8, %6, %cst_10 {dimension_numbers = #tpu.dot_dimension_numbers<[1], [0], [0], [1], [0, 0, 1, 1], [], []>} : vector<16x4xbf16>, vector<4x222xbf16>, vector<16x222xf32> -> vector<16x222xf32>
    %10 = arith.addf %4, %9 : vector<16x222xf32>
    %c0_11 = arith.constant 0 : index
    %c0_12 = arith.constant 0 : index
    %c2 = arith.constant 2 : index
    %11 = vector.load %arg1[%c0_11, %c0_12, %c2] : memref<1x4x256xbf16, #tpu.memory_space<vmem>>, vector<1x4x222xbf16>
    %12 = vector.shape_cast %11 : vector<1x4x222xbf16> to vector<4x222xbf16>
    %c2_13 = arith.constant 2 : index
    %c0_14 = arith.constant 0 : index
    %c0_15 = arith.constant 0 : index
    %13 = vector.load %arg2[%c2_13, %c0_14, %c0_15] : memref<9x16x4xbf16, #tpu.memory_space<vmem>>, vector<1x16x4xbf16>
    %14 = vector.shape_cast %13 : vector<1x16x4xbf16> to vector<16x4xbf16>
    %cst_16 = arith.constant dense<0.000000e+00> : vector<16x222xf32>
    %15 = tpu.matmul %14, %12, %cst_16 {dimension_numbers = #tpu.dot_dimension_numbers<[1], [0], [0], [1], [0, 0, 1, 1], [], []>} : vector<16x4xbf16>, vector<4x222xbf16>, vector<16x222xf32> -> vector<16x222xf32>
    %16 = arith.addf %10, %15 : vector<16x222xf32>
    %c0_17 = arith.constant 0 : index
    %c0_18 = arith.constant 0 : index
    %c16 = arith.constant 16 : index
    %17 = vector.load %arg1[%c0_17, %c0_18, %c16] : memref<1x4x256xbf16, #tpu.memory_space<vmem>>, vector<1x4x222xbf16>
    %18 = vector.shape_cast %17 : vector<1x4x222xbf16> to vector<4x222xbf16>
    %c3 = arith.constant 3 : index
    %c0_19 = arith.constant 0 : index
    %c0_20 = arith.constant 0 : index
    %19 = vector.load %arg2[%c3, %c0_19, %c0_20] : memref<9x16x4xbf16, #tpu.memory_space<vmem>>, vector<1x16x4xbf16>
    %20 = vector.shape_cast %19 : vector<1x16x4xbf16> to vector<16x4xbf16>
    %cst_21 = arith.constant dense<0.000000e+00> : vector<16x222xf32>
    %21 = tpu.matmul %20, %18, %cst_21 {dimension_numbers = #tpu.dot_dimension_numbers<[1], [0], [0], [1], [0, 0, 1, 1], [], []>} : vector<16x4xbf16>, vector<4x222xbf16>, vector<16x222xf32> -> vector<16x222xf32>
    %22 = arith.addf %16, %21 : vector<16x222xf32>
    %c0_22 = arith.constant 0 : index
    %c0_23 = arith.constant 0 : index
    %c17 = arith.constant 17 : index
    %23 = vector.load %arg1[%c0_22, %c0_23, %c17] : memref<1x4x256xbf16, #tpu.memory_space<vmem>>, vector<1x4x222xbf16>
    %24 = vector.shape_cast %23 : vector<1x4x222xbf16> to vector<4x222xbf16>
    %c4 = arith.constant 4 : index
    %c0_24 = arith.constant 0 : index
    %c0_25 = arith.constant 0 : index
    %25 = vector.load %arg2[%c4, %c0_24, %c0_25] : memref<9x16x4xbf16, #tpu.memory_space<vmem>>, vector<1x16x4xbf16>
    %26 = vector.shape_cast %25 : vector<1x16x4xbf16> to vector<16x4xbf16>
    %cst_26 = arith.constant dense<0.000000e+00> : vector<16x222xf32>
    %27 = tpu.matmul %26, %24, %cst_26 {dimension_numbers = #tpu.dot_dimension_numbers<[1], [0], [0], [1], [0, 0, 1, 1], [], []>} : vector<16x4xbf16>, vector<4x222xbf16>, vector<16x222xf32> -> vector<16x222xf32>
    %28 = arith.addf %22, %27 : vector<16x222xf32>
    %c0_27 = arith.constant 0 : index
    %c0_28 = arith.constant 0 : index
    %c18 = arith.constant 18 : index
    %29 = vector.load %arg1[%c0_27, %c0_28, %c18] : memref<1x4x256xbf16, #tpu.memory_space<vmem>>, vector<1x4x222xbf16>
    %30 = vector.shape_cast %29 : vector<1x4x222xbf16> to vector<4x222xbf16>
    %c5 = arith.constant 5 : index
    %c0_29 = arith.constant 0 : index
    %c0_30 = arith.constant 0 : index
    %31 = vector.load %arg2[%c5, %c0_29, %c0_30] : memref<9x16x4xbf16, #tpu.memory_space<vmem>>, vector<1x16x4xbf16>
    %32 = vector.shape_cast %31 : vector<1x16x4xbf16> to vector<16x4xbf16>
    %cst_31 = arith.constant dense<0.000000e+00> : vector<16x222xf32>
    %33 = tpu.matmul %32, %30, %cst_31 {dimension_numbers = #tpu.dot_dimension_numbers<[1], [0], [0], [1], [0, 0, 1, 1], [], []>} : vector<16x4xbf16>, vector<4x222xbf16>, vector<16x222xf32> -> vector<16x222xf32>
    %34 = arith.addf %28, %33 : vector<16x222xf32>
    %c0_32 = arith.constant 0 : index
    %c0_33 = arith.constant 0 : index
    %c32 = arith.constant 32 : index
    %35 = vector.load %arg1[%c0_32, %c0_33, %c32] : memref<1x4x256xbf16, #tpu.memory_space<vmem>>, vector<1x4x222xbf16>
    %36 = vector.shape_cast %35 : vector<1x4x222xbf16> to vector<4x222xbf16>
    %c6 = arith.constant 6 : index
    %c0_34 = arith.constant 0 : index
    %c0_35 = arith.constant 0 : index
    %37 = vector.load %arg2[%c6, %c0_34, %c0_35] : memref<9x16x4xbf16, #tpu.memory_space<vmem>>, vector<1x16x4xbf16>
    %38 = vector.shape_cast %37 : vector<1x16x4xbf16> to vector<16x4xbf16>
    %cst_36 = arith.constant dense<0.000000e+00> : vector<16x222xf32>
    %39 = tpu.matmul %38, %36, %cst_36 {dimension_numbers = #tpu.dot_dimension_numbers<[1], [0], [0], [1], [0, 0, 1, 1], [], []>} : vector<16x4xbf16>, vector<4x222xbf16>, vector<16x222xf32> -> vector<16x222xf32>
    %40 = arith.addf %34, %39 : vector<16x222xf32>
    %c0_37 = arith.constant 0 : index
    %c0_38 = arith.constant 0 : index
    %c33 = arith.constant 33 : index
    %41 = vector.load %arg1[%c0_37, %c0_38, %c33] : memref<1x4x256xbf16, #tpu.memory_space<vmem>>, vector<1x4x222xbf16>
    %42 = vector.shape_cast %41 : vector<1x4x222xbf16> to vector<4x222xbf16>
    %c7 = arith.constant 7 : index
    %c0_39 = arith.constant 0 : index
    %c0_40 = arith.constant 0 : index
    %43 = vector.load %arg2[%c7, %c0_39, %c0_40] : memref<9x16x4xbf16, #tpu.memory_space<vmem>>, vector<1x16x4xbf16>
    %44 = vector.shape_cast %43 : vector<1x16x4xbf16> to vector<16x4xbf16>
    %cst_41 = arith.constant dense<0.000000e+00> : vector<16x222xf32>
    %45 = tpu.matmul %44, %42, %cst_41 {dimension_numbers = #tpu.dot_dimension_numbers<[1], [0], [0], [1], [0, 0, 1, 1], [], []>} : vector<16x4xbf16>, vector<4x222xbf16>, vector<16x222xf32> -> vector<16x222xf32>
    %46 = arith.addf %40, %45 : vector<16x222xf32>
    %c0_42 = arith.constant 0 : index
    %c0_43 = arith.constant 0 : index
    %c34 = arith.constant 34 : index
    %47 = vector.load %arg1[%c0_42, %c0_43, %c34] : memref<1x4x256xbf16, #tpu.memory_space<vmem>>, vector<1x4x222xbf16>
    %48 = vector.shape_cast %47 : vector<1x4x222xbf16> to vector<4x222xbf16>
    %c8 = arith.constant 8 : index
    %c0_44 = arith.constant 0 : index
    %c0_45 = arith.constant 0 : index
    %49 = vector.load %arg2[%c8, %c0_44, %c0_45] : memref<9x16x4xbf16, #tpu.memory_space<vmem>>, vector<1x16x4xbf16>
    %50 = vector.shape_cast %49 : vector<1x16x4xbf16> to vector<16x4xbf16>
    %cst_46 = arith.constant dense<0.000000e+00> : vector<16x222xf32>
    %51 = tpu.matmul %50, %48, %cst_46 {dimension_numbers = #tpu.dot_dimension_numbers<[1], [0], [0], [1], [0, 0, 1, 1], [], []>} : vector<16x4xbf16>, vector<4x222xbf16>, vector<16x222xf32> -> vector<16x222xf32>
    %52 = arith.addf %46, %51 : vector<16x222xf32>
    %c0_47 = arith.constant 0 : index
    %c0_48 = arith.constant 0 : index
    %53 = vector.load %arg3[%c0_47, %c0_48] : memref<16x1xf32, #tpu.memory_space<vmem>>, vector<16x1xf32>
    %54 = vector.broadcast %53 : vector<16x1xf32> to vector<16x222xf32>
    %55 = arith.mulf %52, %54 : vector<16x222xf32>
    %c0_49 = arith.constant 0 : index
    %c0_50 = arith.constant 0 : index
    %56 = vector.load %arg4[%c0_49, %c0_50] : memref<16x1xf32, #tpu.memory_space<vmem>>, vector<16x1xf32>
    %57 = vector.broadcast %56 : vector<16x1xf32> to vector<16x222xf32>
    %58 = arith.addf %55, %57 : vector<16x222xf32>
    %cst_51 = arith.constant 0.000000e+00 : f32
    %59 = vector.broadcast %cst_51 : f32 to vector<16x222xf32>
    %60 = arith.maximumf %58, %59 : vector<16x222xf32>
    %61 = arith.truncf %60 : vector<16x222xf32> to vector<16x222xbf16>
    %c0_52 = arith.constant 0 : index
    %c0_53 = arith.constant 0 : index
    %c0_54 = arith.constant 0 : index
    %62 = vector.load %arg5[%c0_52, %c0_53, %c0_54] : memref<1x16x222xbf16, #tpu.memory_space<vmem>>, vector<1x16x222xbf16>
    %63 = vector.shape_cast %62 : vector<1x16x222xbf16> to vector<16x222xbf16>
    %64 = vector.shape_cast %61 : vector<16x222xbf16> to vector<1x16x222xbf16>
    tpu.vector_store %arg5[%c0_52, %c0_53, %c0_54], %64 {strides = array<i32>} : memref<1x16x222xbf16, #tpu.memory_space<vmem>>, vector<1x16x222xbf16>,
    return
  }
  func.func @transform_0(%arg0: i32) -> (i32, i32, i32) {
    %c0_i32 = arith.constant 0 : i32
    %c0_i32_0 = arith.constant 0 : i32
    %c0_i32_1 = arith.constant 0 : i32
    return %arg0, %c0_i32, %c0_i32_0 : i32, i32, i32
  }
  func.func @transform_1(%arg0: i32) -> (i32, i32, i32) {
    %c0_i32 = arith.constant 0 : i32
    %c0_i32_0 = arith.constant 0 : i32
    %c0_i32_1 = arith.constant 0 : i32
    %c0_i32_2 = arith.constant 0 : i32
    return %c0_i32, %c0_i32_0, %c0_i32_1 : i32, i32, i32
  }
  func.func @transform_2(%arg0: i32) -> (i32, i32) {
    %c0_i32 = arith.constant 0 : i32
    %c0_i32_0 = arith.constant 0 : i32
    %c0_i32_1 = arith.constant 0 : i32
    return %c0_i32, %c0_i32_0 : i32, i32
  }
  func.func @transform_3(%arg0: i32) -> (i32, i32) {
    %c0_i32 = arith.constant 0 : i32
    %c0_i32_0 = arith.constant 0 : i32
    %c0_i32_1 = arith.constant 0 : i32
    return %c0_i32, %c0_i32_0 : i32, i32
  }
  func.func @transform_4(%arg0: i32) -> (i32, i32, i32) {
    %c0_i32 = arith.constant 0 : i32
    %c0_i32_0 = arith.constant 0 : i32
    %c0_i32_1 = arith.constant 0 : i32
    return %arg0, %c0_i32, %c0_i32_0 : i32, i32, i32
  }
}

</mosaic_0001>

<llo_original>
// kernel: conv_bn_relu.1
$region0: #{conv_bn_relu.1}
  #allocation0 [shape = 'u32[]', space=smem, size = 0x4, offset = 0x4, fixed_abs, tag = 'smem constant byte address 0x4 - core index']
  #allocation1 [shape = 'u32[144,128]{1,0:T(1,128)}', space=vmem, size = 0x12000, scoped, tag = 'internal scratch']
  %s0 = inlined_call_operand.vmem [shape: bf16[2,4,256], index: 0, kind: input, shape index: {}]
  %s1 = inlined_call_operand.vmem [shape: bf16[9,16,4], index: 1, kind: input, shape index: {}]
  %s2 = inlined_call_operand.vmem [shape: f32[16,1], index: 2, kind: input, shape index: {}]
  %s3 = inlined_call_operand.vmem [shape: f32[16,1], index: 3, kind: input, shape index: {}]
  %s4 = inlined_call_operand.vmem [shape: bf16[2,16,222], index: 4, kind: output, shape index: {}]
  %s5 = sld [smem:[#allocation0]]
  $region49: #{conv_bn_relu.1} parent=0
    _
  %s7 = ssub.s32 1, %s5
  %s8 = scalar_select 0, %s7, %s5
  loop: start=0, step=1, limit=4
  $region2: #{conv_bn_relu.1} parent=0 // loop_pre_header
    _
  $region3: #{conv_bn_relu.1} parent=0 // loop_header
    %s10 = sphi 0, %s14
    %p11 = scmp.ge.s32.totalorder %s10, 4
    %s20 = sphi 0, %s22
    %s23 = sphi 0, %s20
    %s24 = sphi 0, %s23
    %s40 = sphi 0, %s24
    %s44 = sphi 0, %s44
    %s46 = sphi 0, %s44
    %s47 = sphi 0, %s46
    %s61 = sphi 0, %s47
    %s65 = sphi 0, %s65
    %s67 = sphi 0, %s65
    %s68 = sphi 0, %s67
    %s82 = sphi 0, %s68
    %s86 = sphi 0, %s86
    %s88 = sphi 0, %s86
    %s89 = sphi 0, %s88
    %s103 = sphi 0, %s89
    %s109 = sphi 0, %s111
    %s112 = sphi 0, %s109
    %s113 = sphi 0, %s112
    %s129 = sphi 0, %s113
  $region4: #{conv_bn_relu.1} parent=0 // loop_header_branch
    %13 = sbr.rel (%p11) target = $region8
  $region5: #{conv_bn_relu.1} parent=0 // loop_body
    %s15 = ssub.s32 %s10, 1
    %s16 = ssub.s32 %s10, 2
    %s17 = sadd.s32 %s10, 1
    %s18 = ssub.s32 %s10, %s17
    %p19 = scmp.eq.s32.totalorder %s18, 0
    %s21 = sadd.s32 %s20, 1
    %s22 = scalar_select %p19, %s20, %s21
    %p25 = pneg %p19
    %p26 = scmp.eq.s32.totalorder %s10, 1
    %p27 = por %p25, %p26
    %p28 = scmp.ne.s32.totalorder %s20, %s23
    %p29 = scmp.eq.s32.totalorder %s10, 0
    %p30 = por %p28, %p29
    %p31 = scmp.ne.s32.totalorder %s20, %s23
    %p32 = scmp.eq.s32.totalorder %s15, 1
    %p33 = por %p31, %p32
    %p34 = scmp.ne.s32.totalorder %s23, %s24
    %p35 = scmp.eq.s32.totalorder %s15, 0
    %p36 = por %p34, %p35
    %p37 = scmp.ne.s32.totalorder %s23, %s24
    %p38 = scmp.eq.s32.totalorder %s16, 1
    %p39 = por %p37, %p38
    %p41 = scmp.ne.s32.totalorder %s24, %s40
    %p42 = scmp.eq.s32.totalorder %s16, 0
    %p43 = por %p41, %p42
    %s45 = sadd.s32 %s44, 1
    %p48 = scmp.eq.s32.totalorder %s10, 1
    %p49 = scmp.ne.s32.totalorder %s44, %s46
    %p50 = scmp.eq.s32.totalorder %s10, 0
    %p51 = por %p49, %p50
    %p52 = scmp.ne.s32.totalorder %s44, %s46
    %p53 = scmp.eq.s32.totalorder %s15, 1
    %p54 = por %p52, %p53
    %p55 = scmp.ne.s32.totalorder %s46, %s47
    %p56 = scmp.eq.s32.totalorder %s15, 0
    %p57 = por %p55, %p56
    %p58 = scmp.ne.s32.totalorder %s46, %s47
    %p59 = scmp.eq.s32.totalorder %s16, 1
    %p60 = por %p58, %p59
    %p62 = scmp.ne.s32.totalorder %s47, %s61
    %p63 = scmp.eq.s32.totalorder %s16, 0
    %p64 = por %p62, %p63
    %s66 = sadd.s32 %s65, 1
    %p69 = scmp.eq.s32.totalorder %s10, 1
    %p70 = scmp.ne.s32.totalorder %s65, %s67
    %p71 = scmp.eq.s32.totalorder %s10, 0
    %p72 = por %p70, %p71
    %p73 = scmp.ne.s32.totalorder %s65, %s67
    %p74 = scmp.eq.s32.totalorder %s15, 1
    %p75 = por %p73, %p74
    %p76 = scmp.ne.s32.totalorder %s67, %s68
    %p77 = scmp.eq.s32.totalorder %s15, 0
    %p78 = por %p76, %p77
    %p79 = scmp.ne.s32.totalorder %s67, %s68
    %p80 = scmp.eq.s32.totalorder %s16, 1
    %p81 = por %p79, %p80
    %p83 = scmp.ne.s32.totalorder %s68, %s82
    %p84 = scmp.eq.s32.totalorder %s16, 0
    %p85 = por %p83, %p84
    %s87 = sadd.s32 %s86, 1
    %p90 = scmp.eq.s32.totalorder %s10, 1
    %p91 = scmp.ne.s32.totalorder %s86, %s88
    %p92 = scmp.eq.s32.totalorder %s10, 0
    %p93 = por %p91, %p92
    %p94 = scmp.ne.s32.totalorder %s86, %s88
    %p95 = scmp.eq.s32.totalorder %s15, 1
    %p96 = por %p94, %p95
    %p97 = scmp.ne.s32.totalorder %s88, %s89
    %p98 = scmp.eq.s32.totalorder %s15, 0
    %p99 = por %p97, %p98
    %p100 = scmp.ne.s32.totalorder %s88, %s89
    %p101 = scmp.eq.s32.totalorder %s16, 1
    %p102 = por %p100, %p101
    %p104 = scmp.ne.s32.totalorder %s89, %s103
    %p105 = scmp.eq.s32.totalorder %s16, 0
    %p106 = por %p104, %p105
    %s107 = ssub.s32 %s10, %s17
    %p108 = scmp.eq.s32.totalorder %s107, 0
    %s110 = sadd.s32 %s109, 1
    %s111 = scalar_select %p108, %s109, %s110
    %p114 = pneg %p108
    %p115 = scmp.eq.s32.totalorder %s10, 1
    %p116 = por %p114, %p115
    %p117 = scmp.ne.s32.totalorder %s109, %s112
    %p118 = scmp.eq.s32.totalorder %s10, 0
    %p119 = por %p117, %p118
    %p120 = scmp.ne.s32.totalorder %s109, %s112
    %p121 = scmp.eq.s32.totalorder %s15, 1
    %p122 = por %p120, %p121
    %p123 = scmp.ne.s32.totalorder %s112, %s113
    %p124 = scmp.eq.s32.totalorder %s15, 0
    %p125 = por %p123, %p124
    %p126 = scmp.ne.s32.totalorder %s112, %s113
    %p127 = scmp.eq.s32.totalorder %s16, 1
    %p128 = por %p126, %p127
    %p130 = scmp.ne.s32.totalorder %s113, %s129
    %p131 = scmp.eq.s32.totalorder %s16, 0
    %p132 = por %p130, %p131
    %p133 = scmp.le.s32.totalorder 1, %s10
    %p134 = scmp.lt.s32.totalorder %s10, 3
    %p135 = pnand %p133, %p134
    %p136 = pneg %p135
    // Predicated region
    $region9: #{conv_bn_relu.1} parent=5 // pred_check
      _
    $region10: #{conv_bn_relu.1} parent=5 // pred_check_branch
      %138 = sbr.rel (%p135) target = $region12
    $region11: #{conv_bn_relu.1} parent=5 // pred_region
      %s139 = ssub.s32 %s10, 1
      // Predicated region
      $region13: #{conv_bn_relu.1} parent=11 // pred_check
        %p140 = pneg %p57
      $region14: #{conv_bn_relu.1} parent=11 // pred_check_branch
        %142 = sbr.rel (%p140) target = $region16
      $region15: #{conv_bn_relu.1} parent=11 // pred_region
        _
      $region16: #{conv_bn_relu.1} parent=11 // pred_fallthru
        _
      // Predicated region
      $region17: #{conv_bn_relu.1} parent=11 // pred_check
        %p143 = pneg %p78
      $region18: #{conv_bn_relu.1} parent=11 // pred_check_branch
        %145 = sbr.rel (%p143) target = $region20
      $region19: #{conv_bn_relu.1} parent=11 // pred_region
        _
      $region20: #{conv_bn_relu.1} parent=11 // pred_fallthru
        _
      // Predicated region
      $region21: #{conv_bn_relu.1} parent=11 // pred_check
        %p146 = pneg %p99
      $region22: #{conv_bn_relu.1} parent=11 // pred_check_branch
        %148 = sbr.rel (%p146) target = $region24
      $region23: #{conv_bn_relu.1} parent=11 // pred_region
        _
      $region24: #{conv_bn_relu.1} parent=11 // pred_fallthru
        _
    $region12: #{conv_bn_relu.1} parent=5 // pred_fallthru
      _
    %p149 = scmp.lt.s32.totalorder %s10, 2
    // Predicated region
    $region25: #{conv_bn_relu.1} parent=5 // pred_check
      %p150 = pneg %p149
    $region26: #{conv_bn_relu.1} parent=5 // pred_check_branch
      %152 = sbr.rel (%p150) target = $region28
    $region27: #{conv_bn_relu.1} parent=5 // pred_region
      // Predicated region
      $region29: #{conv_bn_relu.1} parent=27 // pred_check
        %p153 = pneg %p30
      $region30: #{conv_bn_relu.1} parent=27 // pred_check_branch
        %155 = sbr.rel (%p153) target = $region32
      $region31: #{conv_bn_relu.1} parent=27 // pred_region
        %p156 = scmp.lt.s32.totalorder %s10, 1
        %s157 = scalar_select %p156, %s10, 1
        %s158 = smul.addr %s157, 2
        %s159 = smul.addr %s158, 2
        %s160 = scalar_lea.vmem %s0, %s159
      $region32: #{conv_bn_relu.1} parent=27 // pred_fallthru
        _
    $region28: #{conv_bn_relu.1} parent=5 // pred_fallthru
      _
    %p161 = scmp.le.s32.totalorder 1, %s10
    %p162 = scmp.lt.s32.totalorder %s10, 3
    %p163 = pnand %p161, %p162
    %p164 = pneg %p163
    // Predicated region
    $region33: #{conv_bn_relu.1} parent=5 // pred_check
      _
    $region34: #{conv_bn_relu.1} parent=5 // pred_check_branch
      %166 = sbr.rel (%p163) target = $region36
    $region35: #{conv_bn_relu.1} parent=5 // pred_region
      %s167 = ssub.s32 %s10, 1
      %p168 = scmp.lt.s32.totalorder %s15, 1
      %s169 = scalar_select %p168, %s15, 1
      %s170 = smul.addr %s169, 2
      %s171 = smul.addr %s170, 2
      %s172 = scalar_lea.vmem %s0, %s171
      %p173 = pneg %p36
      %p174 = pneg %p33
      %p175 = pneg %p57
      %p176 = pneg %p54
      %p177 = pneg %p78
      %p178 = pneg %p75
      %p179 = pneg %p99
      %p180 = pneg %p96
      %p181 = pneg %p125
      %p182 = pneg %p122
      %p183 = scmp.lt.s32.totalorder %s15, 1
      %s184 = scalar_select %p183, %s15, 1
      %s185 = smul.addr %s184, 4
      %s186 = smul.addr %s185, 4
      %s187 = scalar_lea.vmem %s4, %s186
      %p188 = scmp.lt.s32.totalorder %s15, 1
      %s189 = scalar_select %p188, %s15, 1
      %s190 = smul.addr %s189, 2
      %s191 = smul.addr %s190, 2
      %s192 = scalar_lea.vmem %s0, %s191
      %p193 = scmp.lt.s32.totalorder %s15, 1
      %s194 = scalar_select %p193, %s15, 1
      %s195 = smul.addr %s194, 4
      %s196 = smul.addr %s195, 4
      %s197 = scalar_lea.vmem %s4, %s196
      %v199 = vld [vmem:[%s192] sm:$0xf]
      %v200 = vld [vmem:[%s1] sm:$0xf]
      %v201 = vld [vmem:[%s1 + $0x4] sm:$0xf]
      %s202 = scalar_lea.vmem %s1, 8
      %v203 = vld [vmem:[%s202] sm:$0xf]
      %v204 = vld [vmem:[%s202 + $0x4] sm:$0xf]
      %v207 = vunpack.c.l.b16 %v203
      %v208 = vunpack.c.l.b16 %v204
      %v209 = vpack.c.b16 %v208, %v207
      %v212 = vunpack.c.l.s4 1983009808
      %v213 = vunpack.c.0.s8 %v212
      %v214 = vlaneseq
      %v215 = vshrl.u32 %v214, 7
      %v216 = vsub.s32 %v213, %v215
      %v217 = vrot.slane %v199, %v216
      %v218 = vcombine.high %v217, %v217
      %219 = vrot.lane.b32.xlu0 %v217, 127
      %v220 = vpop.permute.xlu0 %219
      %221 = vrot.lane.b32.xlu0 %v218, 127
      %v222 = vpop.permute.xlu0 %221
      %vm223 = vcmask 1039360
      %v224 = vsel %vm223, %v220, %v222
      %vm225 = vcmask 31744
      %v227 = vsel %vm225, %v209, 0
      %vm229 = vcmask 1041408
      %v231 = vsel %vm229, %v224, 0
      %v234 = vsel %vm229, %v222, 0
      %236 = vmatprep.subr.bf16.mxu0 %v234
      %237 = vmatpush1.bf16.msra.mxu0 %v231
      %238 = vmatprep.subr.bf16.mxu0 0
      %239 = vmatpush1.bf16.msra.mxu0 0
      %240 = vmatprep.subr.bf16.mxu0 0
      %241 = vmatpush1.bf16.msra.mxu0 0
      %242 = vmatprep.subr.bf16.mxu0 0
      %243 = vmatpush1.bf16.msra.mxu0 0
      %244 = vmatprep.subr.bf16.mxu0 0
      %245 = vmatpush1.bf16.msra.mxu0 0
      %246 = vmatprep.subr.bf16.mxu0 0
      %247 = vmatpush1.bf16.msra.mxu0 0
      %248 = vmatprep.subr.bf16.mxu0 0
      %249 = vmatpush1.bf16.msra.mxu0 0
      %250 = vmatprep.subr.bf16.mxu0 0
      %251 = vmatpush1.bf16.msra.mxu0 0
      %252 = vmatprep.subr.bf16.mxu0 0
      %253 = vmatpush1.bf16.msra.mxu0 0
      %254 = vmatprep.subr.bf16.mxu0 0
      %255 = vmatpush1.bf16.msra.mxu0 0
      %256 = vmatprep.subr.bf16.mxu0 0
      %257 = vmatpush1.bf16.msra.mxu0 0
      %258 = vmatprep.subr.bf16.mxu0 0
      %259 = vmatpush1.bf16.msra.mxu0 0
      %260 = vmatprep.subr.bf16.mxu0 0
      %261 = vmatpush1.bf16.msra.mxu0 0
      %262 = vmatprep.subr.bf16.mxu0 0
      %263 = vmatpush1.bf16.msra.mxu0 0
      %264 = vmatprep.subr.bf16.mxu0 0
      %265 = vmatpush1.bf16.msra.mxu0 0
      %266 = vmatprep.subr.bf16.mxu0 0
      %267 = vmatpush1.bf16.msra.mxu0 0
      %268 = vmatprep.mubr.bf16.mxu0 0
      %269 = vmatmul.mubr.bf16.gmra.mrb[0].mxu0 %v227
      %v270 = vpop.f32.mrb[0].mxu0
      %v271 = vadd.f32 0.0, %v270
      %v272 = vpop.f32.mrb[0].mxu0
      %v273 = vadd.f32 0.0, %v272
      %v274 = vpop.f32.mrb[0].mxu0
      %v275 = vadd.f32 0.0, %v274
      %v276 = vpop.f32.mrb[0].mxu0
      %v277 = vadd.f32 0.0, %v276
      %278 = vdwg.mxu0
      %v281 = vunpack.c.l.b16 %v200
      %v282 = vunpack.c.l.b16 %v201
      %v283 = vpack.c.b16 %v282, %v281
      %v285 = vsel %vm225, %v283, 0
      %v288 = vsel %vm229, %v217, 0
      %v291 = vsel %vm229, %v218, 0
      %293 = vmatprep.subr.bf16.mxu0 %v291
      %294 = vmatpush1.bf16.msra.mxu0 %v288
      %295 = vmatprep.subr.bf16.mxu0 0
      %296 = vmatpush1.bf16.msra.mxu0 0
      %297 = vmatprep.subr.bf16.mxu0 0
      %298 = vmatpush1.bf16.msra.mxu0 0
      %299 = vmatprep.subr.bf16.mxu0 0
      %300 = vmatpush1.bf16.msra.mxu0 0
      %301 = vmatprep.subr.bf16.mxu0 0
      %302 = vmatpush1.bf16.msra.mxu0 0
      %303 = vmatprep.subr.bf16.mxu0 0
      %304 = vmatpush1.bf16.msra.mxu0 0
      %305 = vmatprep.subr.bf16.mxu0 0
      %306 = vmatpush1.bf16.msra.mxu0 0
      %307 = vmatprep.subr.bf16.mxu0 0
      %308 = vmatpush1.bf16.msra.mxu0 0
      %309 = vmatprep.subr.bf16.mxu0 0
      %310 = vmatpush1.bf16.msra.mxu0 0
      %311 = vmatprep.subr.bf16.mxu0 0
      %312 = vmatpush1.bf16.msra.mxu0 0
      %313 = vmatprep.subr.bf16.mxu0 0
      %314 = vmatpush1.bf16.msra.mxu0 0
      %315 = vmatprep.subr.bf16.mxu0 0
      %316 = vmatpush1.bf16.msra.mxu0 0
      %317 = vmatprep.subr.bf16.mxu0 0
      %318 = vmatpush1.bf16.msra.mxu0 0
      %319 = vmatprep.subr.bf16.mxu0 0
      %320 = vmatpush1.bf16.msra.mxu0 0
      %321 = vmatprep.subr.bf16.mxu0 0
      %322 = vmatpush1.bf16.msra.mxu0 0
      %323 = vmatprep.subr.bf16.mxu0 0
      %324 = vmatpush1.bf16.msra.mxu0 0
      %325 = vmatprep.mubr.bf16.mxu0 0
      %326 = vmatmul.mubr.bf16.gmra.mrb[0].mxu0 %v285
      %v327 = vpop.f32.mrb[0].mxu0
      %v328 = vadd.f32 %v271, %v327
      %v329 = vpop.f32.mrb[0].mxu0
      %v330 = vadd.f32 %v273, %v329
      %v331 = vpop.f32.mrb[0].mxu0
      %v332 = vadd.f32 %v275, %v331
      %v333 = vpop.f32.mrb[0].mxu0
      %v334 = vadd.f32 %v277, %v333
      %335 = vdwg.mxu0
      %v336 = vld [vmem:[%s192] sm:$0xf]
      %s337 = scalar_lea.vmem %s1, 16
      %v338 = vld [vmem:[%s337] sm:$0xf]
      %v339 = vld [vmem:[%s337 + $0x4] sm:$0xf]
      %v342 = vunpack.c.l.b16 %v338
      %v343 = vunpack.c.l.b16 %v339
      %v344 = vpack.c.b16 %v343, %v342
      %v347 = vunpack.c.l.s4 1983009808
      %v348 = vunpack.c.0.s8 %v347
      %v349 = vlaneseq
      %v350 = vshrl.u32 %v349, 7
      %v351 = vsub.s32 %v348, %v350
      %v352 = vrot.slane %v336, %v351
      %v353 = vcombine.high %v352, %v352
      %354 = vrot.lane.b32.xlu0 %v352, 126
      %v355 = vpop.permute.xlu0 %354
      %356 = vrot.lane.b32.xlu0 %v353, 126
      %v357 = vpop.permute.xlu0 %356
      %vm358 = vcmask 1031168
      %v359 = vsel %vm358, %v355, %v357
      %v361 = vsel %vm225, %v344, 0
      %v364 = vsel %vm229, %v359, 0
      %v367 = vsel %vm229, %v357, 0
      %369 = vmatprep.subr.bf16.mxu0 %v367
      %370 = vmatpush1.bf16.msra.mxu0 %v364
      %371 = vmatprep.subr.bf16.mxu0 0
      %372 = vmatpush1.bf16.msra.mxu0 0
      %373 = vmatprep.subr.bf16.mxu0 0
      %374 = vmatpush1.bf16.msra.mxu0 0
      %375 = vmatprep.subr.bf16.mxu0 0
      %376 = vmatpush1.bf16.msra.mxu0 0
      %377 = vmatprep.subr.bf16.mxu0 0
      %378 = vmatpush1.bf16.msra.mxu0 0
      %379 = vmatprep.subr.bf16.mxu0 0
      %380 = vmatpush1.bf16.msra.mxu0 0
      %381 = vmatprep.subr.bf16.mxu0 0
      %382 = vmatpush1.bf16.msra.mxu0 0
      %383 = vmatprep.subr.bf16.mxu0 0
      %384 = vmatpush1.bf16.msra.mxu0 0
      %385 = vmatprep.subr.bf16.mxu0 0
      %386 = vmatpush1.bf16.msra.mxu0 0
      %387 = vmatprep.subr.bf16.mxu0 0
      %388 = vmatpush1.bf16.msra.mxu0 0
      %389 = vmatprep.subr.bf16.mxu0 0
      %390 = vmatpush1.bf16.msra.mxu0 0
      %391 = vmatprep.subr.bf16.mxu0 0
      %392 = vmatpush1.bf16.msra.mxu0 0
      %393 = vmatprep.subr.bf16.mxu0 0
      %394 = vmatpush1.bf16.msra.mxu0 0
      %395 = vmatprep.subr.bf16.mxu0 0
      %396 = vmatpush1.bf16.msra.mxu0 0
      %397 = vmatprep.subr.bf16.mxu0 0
      %398 = vmatpush1.bf16.msra.mxu0 0
      %399 = vmatprep.subr.bf16.mxu0 0
      %400 = vmatpush1.bf16.msra.mxu0 0
      %401 = vmatprep.mubr.bf16.mxu0 0
      %402 = vmatmul.mubr.bf16.gmra.mrb[0].mxu0 %v361
      %v403 = vpop.f32.mrb[0].mxu0
      %v404 = vadd.f32 0.0, %v403
      %v405 = vpop.f32.mrb[0].mxu0
      %v406 = vadd.f32 0.0, %v405
      %v407 = vpop.f32.mrb[0].mxu0
      %v408 = vadd.f32 0.0, %v407
      %v409 = vpop.f32.mrb[0].mxu0
      %v410 = vadd.f32 0.0, %v409
      %411 = vdwg.mxu0
      %v412 = vadd.f32 %v328, %v404
      %v413 = vadd.f32 %v330, %v406
      %v414 = vadd.f32 %v332, %v408
      %v415 = vadd.f32 %v334, %v410
      %v416 = vld [vmem:[%s192] sm:$0xf]
      %s417 = scalar_lea.vmem %s1, 24
      %v418 = vld [vmem:[%s417] sm:$0xf]
      %v419 = vld [vmem:[%s417 + $0x4] sm:$0xf]
      %v422 = vunpack.c.l.b16 %v418
      %v423 = vunpack.c.l.b16 %v419
      %v424 = vpack.c.b16 %v423, %v422
      %v427 = vunpack.c.l.s4 1983009808
      %v428 = vunpack.c.0.s8 %v427
      %v429 = vlaneseq
      %v430 = vshrl.u32 %v429, 7
      %v431 = vsub.s32 %v428, %v430
      %v432 = vrot.slane %v416, %v431
      %v433 = vcombine.high %v432, %v432
      %434 = vrot.lane.b32.xlu0 %v432, 112
      %v435 = vpop.permute.xlu0 %434
      %436 = vrot.lane.b32.xlu0 %v433, 112
      %v437 = vpop.permute.xlu0 %436
      %vm438 = vcmask 916480
      %v439 = vsel %vm438, %v435, %v437
      %v441 = vsel %vm225, %v424, 0
      %v444 = vsel %vm229, %v439, 0
      %v447 = vsel %vm229, %v437, 0
      %449 = vmatprep.subr.bf16.mxu0 %v447
      %450 = vmatpush1.bf16.msra.mxu0 %v444
      %451 = vmatprep.subr.bf16.mxu0 0
      %452 = vmatpush1.bf16.msra.mxu0 0
      %453 = vmatprep.subr.bf16.mxu0 0
      %454 = vmatpush1.bf16.msra.mxu0 0
      %455 = vmatprep.subr.bf16.mxu0 0
      %456 = vmatpush1.bf16.msra.mxu0 0
      %457 = vmatprep.subr.bf16.mxu0 0
      %458 = vmatpush1.bf16.msra.mxu0 0
      %459 = vmatprep.subr.bf16.mxu0 0
      %460 = vmatpush1.bf16.msra.mxu0 0
      %461 = vmatprep.subr.bf16.mxu0 0
      %462 = vmatpush1.bf16.msra.mxu0 0
      %463 = vmatprep.subr.bf16.mxu0 0
      %464 = vmatpush1.bf16.msra.mxu0 0
      %465 = vmatprep.subr.bf16.mxu0 0
      %466 = vmatpush1.bf16.msra.mxu0 0
      %467 = vmatprep.subr.bf16.mxu0 0
      %468 = vmatpush1.bf16.msra.mxu0 0
      %469 = vmatprep.subr.bf16.mxu0 0
      %470 = vmatpush1.bf16.msra.mxu0 0
      %471 = vmatprep.subr.bf16.mxu0 0
      %472 = vmatpush1.bf16.msra.mxu0 0
      %473 = vmatprep.subr.bf16.mxu0 0
      %474 = vmatpush1.bf16.msra.mxu0 0
      %475 = vmatprep.subr.bf16.mxu0 0
      %476 = vmatpush1.bf16.msra.mxu0 0
      %477 = vmatprep.subr.bf16.mxu0 0
      %478 = vmatpush1.bf16.msra.mxu0 0
      %479 = vmatprep.subr.bf16.mxu0 0
      %480 = vmatpush1.bf16.msra.mxu0 0
      %481 = vmatprep.mubr.bf16.mxu0 0
      %482 = vmatmul.mubr.bf16.gmra.mrb[0].mxu0 %v441
      %v483 = vpop.f32.mrb[0].mxu0
      %v484 = vadd.f32 0.0, %v483
      %v485 = vpop.f32.mrb[0].mxu0
      %v486 = vadd.f32 0.0, %v485
      %v487 = vpop.f32.mrb[0].mxu0
      %v488 = vadd.f32 0.0, %v487
      %v489 = vpop.f32.mrb[0].mxu0
      %v490 = vadd.f32 0.0, %v489
      %491 = vdwg.mxu0
      %v492 = vadd.f32 %v412, %v484
      %v493 = vadd.f32 %v413, %v486
      %v494 = vadd.f32 %v414, %v488
      %v495 = vadd.f32 %v415, %v490
      %v496 = vld [vmem:[%s192] sm:$0xf]
      %s497 = scalar_lea.vmem %s1, 32
      %v498 = vld [vmem:[%s497] sm:$0xf]
      %v499 = vld [vmem:[%s497 + $0x4] sm:$0xf]
      %v502 = vunpack.c.l.b16 %v498
      %v503 = vunpack.c.l.b16 %v499
      %v504 = vpack.c.b16 %v503, %v502
      %v507 = vunpack.c.l.s4 1983009808
      %v508 = vunpack.c.0.s8 %v507
      %v509 = vlaneseq
      %v510 = vshrl.u32 %v509, 7
      %v511 = vsub.s32 %v508, %v510
      %v512 = vrot.slane %v496, %v511
      %v513 = vcombine.high %v512, %v512
      %514 = vrot.lane.b32.xlu0 %v512, 111
      %v515 = vpop.permute.xlu0 %514
      %516 = vrot.lane.b32.xlu0 %v513, 111
      %v517 = vpop.permute.xlu0 %516
      %vm518 = vcmask 908288
      %v519 = vsel %vm518, %v515, %v517
      %v521 = vsel %vm225, %v504, 0
      %v524 = vsel %vm229, %v519, 0
      %v527 = vsel %vm229, %v517, 0
      %529 = vmatprep.subr.bf16.mxu0 %v527
      %530 = vmatpush1.bf16.msra.mxu0 %v524
      %531 = vmatprep.subr.bf16.mxu0 0
      %532 = vmatpush1.bf16.msra.mxu0 0
      %533 = vmatprep.subr.bf16.mxu0 0
      %534 = vmatpush1.bf16.msra.mxu0 0
      %535 = vmatprep.subr.bf16.mxu0 0
      %536 = vmatpush1.bf16.msra.mxu0 0
      %537 = vmatprep.subr.bf16.mxu0 0
      %538 = vmatpush1.bf16.msra.mxu0 0
      %539 = vmatprep.subr.bf16.mxu0 0
      %540 = vmatpush1.bf16.msra.mxu0 0
      %541 = vmatprep.subr.bf16.mxu0 0
      %542 = vmatpush1.bf16.msra.mxu0 0
      %543 = vmatprep.subr.bf16.mxu0 0
      %544 = vmatpush1.bf16.msra.mxu0 0
      %545 = vmatprep.subr.bf16.mxu0 0
      %546 = vmatpush1.bf16.msra.mxu0 0
      %547 = vmatprep.subr.bf16.mxu0 0
      %548 = vmatpush1.bf16.msra.mxu0 0
      %549 = vmatprep.subr.bf16.mxu0 0
      %550 = vmatpush1.bf16.msra.mxu0 0
      %551 = vmatprep.subr.bf16.mxu0 0
      %552 = vmatpush1.bf16.msra.mxu0 0
      %553 = vmatprep.subr.bf16.mxu0 0
      %554 = vmatpush1.bf16.msra.mxu0 0
      %555 = vmatprep.subr.bf16.mxu0 0
      %556 = vmatpush1.bf16.msra.mxu0 0
      %557 = vmatprep.subr.bf16.mxu0 0
      %558 = vmatpush1.bf16.msra.mxu0 0
      %559 = vmatprep.subr.bf16.mxu0 0
      %560 = vmatpush1.bf16.msra.mxu0 0
      %561 = vmatprep.mubr.bf16.mxu0 0
      %562 = vmatmul.mubr.bf16.gmra.mrb[0].mxu0 %v521
      %v563 = vpop.f32.mrb[0].mxu0
      %v564 = vadd.f32 0.0, %v563
      %v565 = vpop.f32.mrb[0].mxu0
      %v566 = vadd.f32 0.0, %v565
      %v567 = vpop.f32.mrb[0].mxu0
      %v568 = vadd.f32 0.0, %v567
      %v569 = vpop.f32.mrb[0].mxu0
      %v570 = vadd.f32 0.0, %v569
      %571 = vdwg.mxu0
      %v572 = vadd.f32 %v492, %v564
      %v573 = vadd.f32 %v493, %v566
      %v574 = vadd.f32 %v494, %v568
      %v575 = vadd.f32 %v495, %v570
      %v576 = vld [vmem:[%s192] sm:$0xf]
      %s577 = scalar_lea.vmem %s1, 40
      %v578 = vld [vmem:[%s577] sm:$0xf]
      %v579 = vld [vmem:[%s577 + $0x4] sm:$0xf]
      %v582 = vunpack.c.l.b16 %v578
      %v583 = vunpack.c.l.b16 %v579
      %v584 = vpack.c.b16 %v583, %v582
      %v587 = vunpack.c.l.s4 1983009808
      %v588 = vunpack.c.0.s8 %v587
      %v589 = vlaneseq
      %v590 = vshrl.u32 %v589, 7
      %v591 = vsub.s32 %v588, %v590
      %v592 = vrot.slane %v576, %v591
      %v593 = vcombine.high %v592, %v592
      %594 = vrot.lane.b32.xlu0 %v592, 110
      %v595 = vpop.permute.xlu0 %594
      %596 = vrot.lane.b32.xlu0 %v593, 110
      %v597 = vpop.permute.xlu0 %596
      %vm598 = vcmask 900096
      %v599 = vsel %vm598, %v595, %v597
      %v601 = vsel %vm225, %v584, 0
      %v604 = vsel %vm229, %v599, 0
      %v607 = vsel %vm229, %v597, 0
      %609 = vmatprep.subr.bf16.mxu0 %v607
      %610 = vmatpush1.bf16.msra.mxu0 %v604
      %611 = vmatprep.subr.bf16.mxu0 0
      %612 = vmatpush1.bf16.msra.mxu0 0
      %613 = vmatprep.subr.bf16.mxu0 0
      %614 = vmatpush1.bf16.msra.mxu0 0
      %615 = vmatprep.subr.bf16.mxu0 0
      %616 = vmatpush1.bf16.msra.mxu0 0
      %617 = vmatprep.subr.bf16.mxu0 0
      %618 = vmatpush1.bf16.msra.mxu0 0
      %619 = vmatprep.subr.bf16.mxu0 0
      %620 = vmatpush1.bf16.msra.mxu0 0
      %621 = vmatprep.subr.bf16.mxu0 0
      %622 = vmatpush1.bf16.msra.mxu0 0
      %623 = vmatprep.subr.bf16.mxu0 0
      %624 = vmatpush1.bf16.msra.mxu0 0
      %625 = vmatprep.subr.bf16.mxu0 0
      %626 = vmatpush1.bf16.msra.mxu0 0
      %627 = vmatprep.subr.bf16.mxu0 0
      %628 = vmatpush1.bf16.msra.mxu0 0
      %629 = vmatprep.subr.bf16.mxu0 0
      %630 = vmatpush1.bf16.msra.mxu0 0
      %631 = vmatprep.subr.bf16.mxu0 0
      %632 = vmatpush1.bf16.msra.mxu0 0
      %633 = vmatprep.subr.bf16.mxu0 0
      %634 = vmatpush1.bf16.msra.mxu0 0
      %635 = vmatprep.subr.bf16.mxu0 0
      %636 = vmatpush1.bf16.msra.mxu0 0
      %637 = vmatprep.subr.bf16.mxu0 0
      %638 = vmatpush1.bf16.msra.mxu0 0
      %639 = vmatprep.subr.bf16.mxu0 0
      %640 = vmatpush1.bf16.msra.mxu0 0
      %641 = vmatprep.mubr.bf16.mxu0 0
      %642 = vmatmul.mubr.bf16.gmra.mrb[0].mxu0 %v601
      %v643 = vpop.f32.mrb[0].mxu0
      %v644 = vadd.f32 0.0, %v643
      %v645 = vpop.f32.mrb[0].mxu0
      %v646 = vadd.f32 0.0, %v645
      %v647 = vpop.f32.mrb[0].mxu0
      %v648 = vadd.f32 0.0, %v647
      %v649 = vpop.f32.mrb[0].mxu0
      %v650 = vadd.f32 0.0, %v649
      %651 = vdwg.mxu0
      %v652 = vadd.f32 %v572, %v644
      %v653 = vadd.f32 %v573, %v646
      %v654 = vadd.f32 %v574, %v648
      %v655 = vadd.f32 %v575, %v650
      %v656 = vld [vmem:[%s192] sm:$0xf]
      %s657 = scalar_lea.vmem %s1, 48
      %v658 = vld [vmem:[%s657] sm:$0xf]
      %v659 = vld [vmem:[%s657 + $0x4] sm:$0xf]
      %v662 = vunpack.c.l.b16 %v658
      %v663 = vunpack.c.l.b16 %v659
      %v664 = vpack.c.b16 %v663, %v662
      %v667 = vunpack.c.l.s4 1983009808
      %v668 = vunpack.c.0.s8 %v667
      %v669 = vlaneseq
      %v670 = vshrl.u32 %v669, 7
      %v671 = vsub.s32 %v668, %v670
      %v672 = vrot.slane %v656, %v671
      %v673 = vcombine.high %v672, %v672
      %674 = vrot.lane.b32.xlu0 %v672, 96
      %v675 = vpop.permute.xlu0 %674
      %676 = vrot.lane.b32.xlu0 %v673, 96
      %v677 = vpop.permute.xlu0 %676
      %vm678 = vcmask 785408
      %v679 = vsel %vm678, %v675, %v677
      %v681 = vsel %vm225, %v664, 0
      %v684 = vsel %vm229, %v679, 0
      %v687 = vsel %vm229, %v677, 0
      %689 = vmatprep.subr.bf16.mxu0 %v687
      %690 = vmatpush1.bf16.msra.mxu0 %v684
      %691 = vmatprep.subr.bf16.mxu0 0
      %692 = vmatpush1.bf16.msra.mxu0 0
      %693 = vmatprep.subr.bf16.mxu0 0
      %694 = vmatpush1.bf16.msra.mxu0 0
      %695 = vmatprep.subr.bf16.mxu0 0
      %696 = vmatpush1.bf16.msra.mxu0 0
      %697 = vmatprep.subr.bf16.mxu0 0
      %698 = vmatpush1.bf16.msra.mxu0 0
      %699 = vmatprep.subr.bf16.mxu0 0
      %700 = vmatpush1.bf16.msra.mxu0 0
      %701 = vmatprep.subr.bf16.mxu0 0
      %702 = vmatpush1.bf16.msra.mxu0 0
      %703 = vmatprep.subr.bf16.mxu0 0
      %704 = vmatpush1.bf16.msra.mxu0 0
      %705 = vmatprep.subr.bf16.mxu0 0
      %706 = vmatpush1.bf16.msra.mxu0 0
      %707 = vmatprep.subr.bf16.mxu0 0
      %708 = vmatpush1.bf16.msra.mxu0 0
      %709 = vmatprep.subr.bf16.mxu0 0
      %710 = vmatpush1.bf16.msra.mxu0 0
      %711 = vmatprep.subr.bf16.mxu0 0
      %712 = vmatpush1.bf16.msra.mxu0 0
      %713 = vmatprep.subr.bf16.mxu0 0
      %714 = vmatpush1.bf16.msra.mxu0 0
      %715 = vmatprep.subr.bf16.mxu0 0
      %716 = vmatpush1.bf16.msra.mxu0 0
      %717 = vmatprep.subr.bf16.mxu0 0
      %718 = vmatpush1.bf16.msra.mxu0 0
      %719 = vmatprep.subr.bf16.mxu0 0
      %720 = vmatpush1.bf16.msra.mxu0 0
      %721 = vmatprep.mubr.bf16.mxu0 0
      %722 = vmatmul.mubr.bf16.gmra.mrb[0].mxu0 %v681
      %v723 = vpop.f32.mrb[0].mxu0
      %v724 = vadd.f32 0.0, %v723
      %v725 = vpop.f32.mrb[0].mxu0
      %v726 = vadd.f32 0.0, %v725
      %v727 = vpop.f32.mrb[0].mxu0
      %v728 = vadd.f32 0.0, %v727
      %v729 = vpop.f32.mrb[0].mxu0
      %v730 = vadd.f32 0.0, %v729
      %731 = vdwg.mxu0
      %v732 = vadd.f32 %v652, %v724
      %v733 = vadd.f32 %v653, %v726
      %v734 = vadd.f32 %v654, %v728
      %v735 = vadd.f32 %v655, %v730
      %v736 = vld [vmem:[%s192] sm:$0xf]
      %s737 = scalar_lea.vmem %s1, 56
      %v738 = vld [vmem:[%s737] sm:$0xf]
      %v739 = vld [vmem:[%s737 + $0x4] sm:$0xf]
      %v742 = vunpack.c.l.b16 %v738
      %v743 = vunpack.c.l.b16 %v739
      %v744 = vpack.c.b16 %v743, %v742
      %v747 = vunpack.c.l.s4 1983009808
      %v748 = vunpack.c.0.s8 %v747
      %v749 = vlaneseq
      %v750 = vshrl.u32 %v749, 7
      %v751 = vsub.s32 %v748, %v750
      %v752 = vrot.slane %v736, %v751
      %v753 = vcombine.high %v752, %v752
      %754 = vrot.lane.b32.xlu0 %v752, 95
      %v755 = vpop.permute.xlu0 %754
      %756 = vrot.lane.b32.xlu0 %v753, 95
      %v757 = vpop.permute.xlu0 %756
      %vm758 = vcmask 777216
      %v759 = vsel %vm758, %v755, %v757
      %v761 = vsel %vm225, %v744, 0
      %v764 = vsel %vm229, %v759, 0
      %v767 = vsel %vm229, %v757, 0
      %769 = vmatprep.subr.bf16.mxu0 %v767
      %770 = vmatpush1.bf16.msra.mxu0 %v764
      %771 = vmatprep.subr.bf16.mxu0 0
      %772 = vmatpush1.bf16.msra.mxu0 0
      %773 = vmatprep.subr.bf16.mxu0 0
      %774 = vmatpush1.bf16.msra.mxu0 0
      %775 = vmatprep.subr.bf16.mxu0 0
      %776 = vmatpush1.bf16.msra.mxu0 0
      %777 = vmatprep.subr.bf16.mxu0 0
      %778 = vmatpush1.bf16.msra.mxu0 0
      %779 = vmatprep.subr.bf16.mxu0 0
      %780 = vmatpush1.bf16.msra.mxu0 0
      %781 = vmatprep.subr.bf16.mxu0 0
      %782 = vmatpush1.bf16.msra.mxu0 0
      %783 = vmatprep.subr.bf16.mxu0 0
      %784 = vmatpush1.bf16.msra.mxu0 0
      %785 = vmatprep.subr.bf16.mxu0 0
      %786 = vmatpush1.bf16.msra.mxu0 0
      %787 = vmatprep.subr.bf16.mxu0 0
      %788 = vmatpush1.bf16.msra.mxu0 0
      %789 = vmatprep.subr.bf16.mxu0 0
      %790 = vmatpush1.bf16.msra.mxu0 0
      %791 = vmatprep.subr.bf16.mxu0 0
      %792 = vmatpush1.bf16.msra.mxu0 0
      %793 = vmatprep.subr.bf16.mxu0 0
      %794 = vmatpush1.bf16.msra.mxu0 0
      %795 = vmatprep.subr.bf16.mxu0 0
      %796 = vmatpush1.bf16.msra.mxu0 0
      %797 = vmatprep.subr.bf16.mxu0 0
      %798 = vmatpush1.bf16.msra.mxu0 0
      %799 = vmatprep.subr.bf16.mxu0 0
      %800 = vmatpush1.bf16.msra.mxu0 0
      %801 = vmatprep.mubr.bf16.mxu0 0
      %802 = vmatmul.mubr.bf16.gmra.mrb[0].mxu0 %v761
      %v803 = vpop.f32.mrb[0].mxu0
      %v804 = vadd.f32 0.0, %v803
      %v805 = vpop.f32.mrb[0].mxu0
      %v806 = vadd.f32 0.0, %v805
      %v807 = vpop.f32.mrb[0].mxu0
      %v808 = vadd.f32 0.0, %v807
      %v809 = vpop.f32.mrb[0].mxu0
      %v810 = vadd.f32 0.0, %v809
      %811 = vdwg.mxu0
      %v812 = vadd.f32 %v732, %v804
      %v813 = vadd.f32 %v733, %v806
      %v814 = vadd.f32 %v734, %v808
      %v815 = vadd.f32 %v735, %v810
      %v816 = vld [vmem:[%s192] sm:$0xf]
      %s817 = scalar_lea.vmem %s1, 64
      %v818 = vld [vmem:[%s817] sm:$0xf]
      %v819 = vld [vmem:[%s817 + $0x4] sm:$0xf]
      %v822 = vunpack.c.l.b16 %v818
      %v823 = vunpack.c.l.b16 %v819
      %v824 = vpack.c.b16 %v823, %v822
      %v827 = vunpack.c.l.s4 1983009808
      %v828 = vunpack.c.0.s8 %v827
      %v829 = vlaneseq
      %v830 = vshrl.u32 %v829, 7
      %v831 = vsub.s32 %v828, %v830
      %v832 = vrot.slane %v816, %v831
      %v833 = vcombine.high %v832, %v832
      %834 = vrot.lane.b32.xlu0 %v832, 94
      %v835 = vpop.permute.xlu0 %834
      %836 = vrot.lane.b32.xlu0 %v833, 94
      %v837 = vpop.permute.xlu0 %836
      %vm838 = vcmask 769024
      %v839 = vsel %vm838, %v835, %v837
      %v841 = vsel %vm225, %v824, 0
      %v844 = vsel %vm229, %v839, 0
      %v847 = vsel %vm229, %v837, 0
      %849 = vmatprep.subr.bf16.mxu0 %v847
      %850 = vmatpush1.bf16.msra.mxu0 %v844
      %851 = vmatprep.subr.bf16.mxu0 0
      %852 = vmatpush1.bf16.msra.mxu0 0
      %853 = vmatprep.subr.bf16.mxu0 0
      %854 = vmatpush1.bf16.msra.mxu0 0
      %855 = vmatprep.subr.bf16.mxu0 0
      %856 = vmatpush1.bf16.msra.mxu0 0
      %857 = vmatprep.subr.bf16.mxu0 0
      %858 = vmatpush1.bf16.msra.mxu0 0
      %859 = vmatprep.subr.bf16.mxu0 0
      %860 = vmatpush1.bf16.msra.mxu0 0
      %861 = vmatprep.subr.bf16.mxu0 0
      %862 = vmatpush1.bf16.msra.mxu0 0
      %863 = vmatprep.subr.bf16.mxu0 0
      %864 = vmatpush1.bf16.msra.mxu0 0
      %865 = vmatprep.subr.bf16.mxu0 0
      %866 = vmatpush1.bf16.msra.mxu0 0
      %867 = vmatprep.subr.bf16.mxu0 0
      %868 = vmatpush1.bf16.msra.mxu0 0
      %869 = vmatprep.subr.bf16.mxu0 0
      %870 = vmatpush1.bf16.msra.mxu0 0
      %871 = vmatprep.subr.bf16.mxu0 0
      %872 = vmatpush1.bf16.msra.mxu0 0
      %873 = vmatprep.subr.bf16.mxu0 0
      %874 = vmatpush1.bf16.msra.mxu0 0
      %875 = vmatprep.subr.bf16.mxu0 0
      %876 = vmatpush1.bf16.msra.mxu0 0
      %877 = vmatprep.subr.bf16.mxu0 0
      %878 = vmatpush1.bf16.msra.mxu0 0
      %879 = vmatprep.subr.bf16.mxu0 0
      %880 = vmatpush1.bf16.msra.mxu0 0
      %881 = vmatprep.mubr.bf16.mxu0 0
      %882 = vmatmul.mubr.bf16.gmra.mrb[0].mxu0 %v841
      %v883 = vpop.f32.mrb[0].mxu0
      %v884 = vadd.f32 0.0, %v883
      %v885 = vpop.f32.mrb[0].mxu0
      %v886 = vadd.f32 0.0, %v885
      %v887 = vpop.f32.mrb[0].mxu0
      %v888 = vadd.f32 0.0, %v887
      %v889 = vpop.f32.mrb[0].mxu0
      %v890 = vadd.f32 0.0, %v889
      %891 = vdwg.mxu0
      %v892 = vadd.f32 %v812, %v884
      %v893 = vadd.f32 %v813, %v886
      %v894 = vadd.f32 %v814, %v888
      %v895 = vadd.f32 %v815, %v890
      %v896 = vld [vmem:[%s2] sm:$0xff]
      %v897 = vld [vmem:[%s2 + $0x8] sm:$0xff]
      %899 = vset.pattern.permute.xlu0 0
      %900 = vperm.xlu0 %899, %v896
      %v901 = vpop.permute.xlu0 %900
      %904 = vset.pattern.permute.xlu0 0
      %905 = vperm.xlu0 %904, %v897
      %v906 = vpop.permute.xlu0 %905
      %v908 = vmul.f32 %v892, %v901
      %v909 = vmul.f32 %v893, %v901
      %v910 = vmul.f32 %v894, %v906
      %v911 = vmul.f32 %v895, %v906
      %v912 = vld [vmem:[%s3] sm:$0xff]
      %v913 = vld [vmem:[%s3 + $0x8] sm:$0xff]
      %915 = vset.pattern.permute.xlu0 0
      %916 = vperm.xlu0 %915, %v912
      %v917 = vpop.permute.xlu0 %916
      %920 = vset.pattern.permute.xlu0 0
      %921 = vperm.xlu0 %920, %v913
      %v922 = vpop.permute.xlu0 %921
      %v924 = vadd.f32 %v908, %v917
      %v925 = vadd.f32 %v909, %v917
      %v926 = vadd.f32 %v910, %v922
      %v927 = vadd.f32 %v911, %v922
      %v928 = vmax.f32 %v924, 0.0
      %v929 = vmax.f32 %v925, 0.0
      %v930 = vmax.f32 %v926, 0.0
      %v931 = vmax.f32 %v927, 0.0
      %v932 = vpack.c.bf16 %v930, %v928
      %v933 = vpack.c.bf16 %v931, %v929
      %v936 = vunpack.c.l.b16 %v932
      %v937 = vunpack.c.l.b16 %v933
      %v938 = vunpack.c.h.b16 %v932
      %v939 = vunpack.c.h.b16 %v933
      %v940 = vpack.c.b16 %v937, %v936
      %v941 = vpack.c.b16 %v939, %v938
      %vm944 = vcmask 1043456
      %vm945 = vcmask 769028
      %vm946 = vmor %vm945, %vm944
      %947 = vst.msk [vmem:[%s197] sm:$0xff] %vm946, %v940
      %948 = vst.msk [vmem:[%s197 + $0x8] sm:$0xff] %vm946, %v941
      %p949 = scmp.lt.s32.totalorder %s15, 1
      %s950 = scalar_select %p949, %s15, 1
      %s951 = smul.addr %s950, 4
      %s952 = smul.addr %s951, 4
      %s953 = scalar_lea.vmem %s4, %s952
      // Predicated region
      $region37: #{conv_bn_relu.1} parent=35 // pred_check
        %p954 = pneg %p122
      $region38: #{conv_bn_relu.1} parent=35 // pred_check_branch
        %956 = sbr.rel (%p954) target = $region40
      $region39: #{conv_bn_relu.1} parent=35 // pred_region
        _
      $region40: #{conv_bn_relu.1} parent=35 // pred_fallthru
        _
    $region36: #{conv_bn_relu.1} parent=5 // pred_fallthru
      _
    %p957 = scmp.le.s32.totalorder 2, %s10
    // Predicated region
    $region41: #{conv_bn_relu.1} parent=5 // pred_check
      %p958 = pneg %p957
    $region42: #{conv_bn_relu.1} parent=5 // pred_check_branch
      %960 = sbr.rel (%p958) target = $region44
    $region43: #{conv_bn_relu.1} parent=5 // pred_region
      %s961 = ssub.s32 %s10, 2
      // Predicated region
      $region45: #{conv_bn_relu.1} parent=43 // pred_check
        %p962 = pneg %p128
      $region46: #{conv_bn_relu.1} parent=43 // pred_check_branch
        %964 = sbr.rel (%p962) target = $region48
      $region47: #{conv_bn_relu.1} parent=43 // pred_region
        %p965 = scmp.lt.s32.totalorder %s16, 1
        %s966 = scalar_select %p965, %s16, 1
        %s967 = smul.addr %s966, 4
        %s968 = smul.addr %s967, 4
        %s969 = scalar_lea.vmem %s4, %s968
      $region48: #{conv_bn_relu.1} parent=43 // pred_fallthru
        _
    $region44: #{conv_bn_relu.1} parent=5 // pred_fallthru
      _
  $region6: #{conv_bn_relu.1} parent=0 // loop_footer
    %s14 = sadd.s32 1, %s10
  $region7: #{conv_bn_relu.1} parent=0 // loop_footer_branch
    %9 = sbr.rel target = $region3
  $region8: #{conv_bn_relu.1} parent=0 // loop_exit
    _

</llo_original>
